<compile_context>
chip_gen: v5e
topology: v5e:2x2
jax: 0.10.0
libtpu: 0.0.40
codegen_flags: <defaults>
</compile_context>

<pallas_src>
import functools

import jax
import jax.numpy as jnp
from jax.experimental import pallas as pl
from jax.experimental.pallas import tpu as pltpu


# ---------------------------------------------------------------------------
# Kernels
# ---------------------------------------------------------------------------
def _scale_kernel(x_ref, o_ref, *, inv_scale):
    # o = float(x) * (1 / ob_scale) -- single VPU multiply per element
    o_ref[...] = (x_ref[...].astype(jnp.float32) * inv_scale).astype(o_ref.dtype)


def _affine_kernel(x_ref, scale_ref, bias_ref, o_ref):
    # o = float(x) * (1/std) + (-mean/std)  ==  (x - mean) / std
    x = x_ref[...].astype(jnp.float32)
    o_ref[...] = (x * scale_ref[...] + bias_ref[...]).astype(o_ref.dtype)


# ---------------------------------------------------------------------------
# Tiling heuristics
# ---------------------------------------------------------------------------
_MAX_FULL_D = 64 * 1024     # keep the frame un-chunked (one contiguous DMA) up to this
_D_CHUNK = 32 * 1024        # chunk size (multiple of 128) for very large frames
_ROW_PACK = 32              # uint8 packed-sublane tile height


@functools.lru_cache(maxsize=1)
def _vmem_budgets():
    """(tile_footprint_budget, vmem_limit_bytes), derived from the core's VMEM capacity."""
    cap = 64 * 1024 * 1024  # conservative default (v7x-class core)
    try:
        info = pltpu.get_tpu_info()
        cap = int(getattr(info, "vmem_capacity_bytes", cap)) or cap
    except Exception:
        pass
    if cap <= 64 * 1024 * 1024:
        # v7x: 64 MiB physical -> leave generous headroom for compiler scratch.
        return 24 * 1024 * 1024, 40 * 1024 * 1024
    # v5e / v6e: 128 MiB physical.
    return 40 * 1024 * 1024, 64 * 1024 * 1024


def _choose_tiling(R, D, in_itemsize, out_itemsize):
    tile_budget, _ = _vmem_budgets()

    # --- D axis: full D when it fits (whole block is one contiguous HBM run); otherwise
    #     fixed 128-multiple chunks with a masked ragged tail (pl.cdiv grid).
    d_tile = D if D <= _MAX_FULL_D else _D_CHUNK

    # --- Row axis: largest multiple of 32 whose double-buffered (input + output) tile
    #     footprint stays under the budget.
    per_row = 2 * d_tile * (in_itemsize + out_itemsize)
    tile_rows = max(_ROW_PACK, (tile_budget // per_row) // _ROW_PACK * _ROW_PACK)

    if tile_rows >= R:
        if R > _ROW_PACK:
            # Split into >=2 row tiles so the parallel axis can shard across both v7x cores.
            tile_rows = pl.cdiv(pl.cdiv(R, 2), _ROW_PACK) * _ROW_PACK
        else:
            # Tiny batch: a single full-extent block (legal even if R % 8 != 0).
            tile_rows = R
    return tile_rows, d_tile


def _compiler_params():
    _, vmem_limit = _vmem_budgets()
    return pltpu.CompilerParams(
        dimension_semantics=("parallel", "parallel"),
        vmem_limit_bytes=vmem_limit,
    )


# ---------------------------------------------------------------------------
# pallas_call wrappers  (grid = (D-chunks outer, row-tiles inner); no pad, no slice)
# ---------------------------------------------------------------------------
def _run_scale(x2d, inv_scale, out_dtype):
    """x2d: (R, D) any int/float dtype -> (R, D) out_dtype = x * inv_scale."""
    R, D = x2d.shape
    tile_rows, d_tile = _choose_tiling(
        R, D, jnp.dtype(x2d.dtype).itemsize, jnp.dtype(out_dtype).itemsize)
    grid = (pl.cdiv(D, d_tile), pl.cdiv(R, tile_rows))

    return pl.pallas_call(
        functools.partial(_scale_kernel, inv_scale=float(inv_scale)),
        out_shape=jax.ShapeDtypeStruct((R, D), out_dtype),
        grid_spec=pltpu.PrefetchScalarGridSpec(
            num_scalar_prefetch=0,
            grid=grid,
            in_specs=[pl.BlockSpec((tile_rows, d_tile), lambda j, i: (i, j))],
            out_specs=pl.BlockSpec((tile_rows, d_tile), lambda j, i: (i, j)),
        ),
        compiler_params=_compiler_params(),
    )(x2d)


def _run_affine(x2d, scale2d, bias2d, out_dtype):
    """x2d: (R, D); scale2d/bias2d: (1, D) f32 -> (R, D) out_dtype = x*scale + bias."""
    R, D = x2d.shape
    tile_rows, d_tile = _choose_tiling(
        R, D, jnp.dtype(x2d.dtype).itemsize, jnp.dtype(out_dtype).itemsize)
    grid = (pl.cdiv(D, d_tile), pl.cdiv(R, tile_rows))

    return pl.pallas_call(
        _affine_kernel,
        out_shape=jax.ShapeDtypeStruct((R, D), out_dtype),
        grid_spec=pltpu.PrefetchScalarGridSpec(
            num_scalar_prefetch=0,
            grid=grid,
            in_specs=[
                pl.BlockSpec((tile_rows, d_tile), lambda j, i: (i, j)),  # image rows
                pl.BlockSpec((1, d_tile), lambda j, i: (0, j)),          # scale (resident over rows)
                pl.BlockSpec((1, d_tile), lambda j, i: (0, j)),          # bias  (resident over rows)
            ],
            out_specs=pl.BlockSpec((tile_rows, d_tile), lambda j, i: (i, j)),
        ),
        compiler_params=_compiler_params(),
    )(x2d, scale2d, bias2d)


# ---------------------------------------------------------------------------
# Module
# ---------------------------------------------------------------------------
class ImgPreprocessing:
    """JAX/Pallas port of the torch ImgPreprocessing module.

    If `img_mean`/`img_std` are given (arrays of the per-frame image shape), normalizes
    with them ((x - mean) / std); otherwise scales by 1/255 (or 1/1 if scale_img=False).
    `output_dtype` defaults to float32 (exact torch semantics); bfloat16 halves the
    writeback traffic of this memory-bound kernel if the consumer tolerates it.
    """
    # TODO(synk): the torch module loads mean/std from an .npz path; here they are
    # passed in directly as arrays (no file I/O in-kernel or in-script).

    def __init__(self, img_mean=None, img_std=None, scale_img: bool = True,
                 output_dtype=jnp.float32):
        self.output_dtype = jnp.dtype(output_dtype)
        self.scale2d = None
        self.bias2d = None
        self.inv_scale = None
        if img_mean is not None:
            mean = jnp.asarray(img_mean, dtype=jnp.float32)
            std = jnp.asarray(img_std, dtype=jnp.float32)
            # Note: zeros in std yield inf/nan exactly like the torch module would.
            # Precompute once (tiny (1, D) arrays): (x - mean)/std == x*(1/std) + (-mean/std)
            self.scale2d = (1.0 / std).reshape(1, -1)
            self.bias2d = (-mean / std).reshape(1, -1)
        else:
            self.inv_scale = 1.0 / (255.0 if scale_img else 1.0)

    def __call__(self, img):
        # img: (..., H, W, C)
        lead_shape = img.shape[:-3]
        frame_shape = img.shape[-3:]
        D = frame_shape[0] * frame_shape[1] * frame_shape[2]
        R = 1
        for s in lead_shape:
            R *= s
        x2d = img.reshape(R, D)

        if self.scale2d is not None:
            out2d = _run_affine(x2d, self.scale2d, self.bias2d, self.output_dtype)
        elif self.inv_scale == 1.0:
            # Pure dtype cast (scale_img=False): no kernel launch needed.
            out2d = x2d.astype(self.output_dtype)
        else:
            out2d = _run_scale(x2d, self.inv_scale, self.output_dtype)

        return out2d.reshape(*lead_shape, *frame_shape)


# ---------------------------------------------------------------------------
# Demo / self-test
# ---------------------------------------------------------------------------
if __name__ == "__main__":
    key = jax.random.PRNGKey(0)
    k_img, k_mean, k_std, k_img2 = jax.random.split(key, 4)

    # Small VPT-style input: (B, T, H, W, C) uint8 image batch.
    B, T, H, W, C = 2, 8, 16, 16, 3
    img = jax.random.randint(k_img, (B, T, H, W, C), 0, 256, dtype=jnp.int32).astype(jnp.uint8)

    # --- Path 1: scale-only (default __init__: img_statistics=None, scale_img=True) ---
    prep_scale = ImgPreprocessing()
    out_scale = jax.block_until_ready(prep_scale(img))
    ref_scale = img.astype(jnp.float32) / 255.0
    assert out_scale.shape == img.shape and out_scale.dtype == jnp.float32
    assert jnp.allclose(out_scale, ref_scale, rtol=1e-6, atol=1e-6), "scale path mismatch"

    # --- Path 2: mean/std statistics (deterministic synthetic stats; no file loading) ---
    img_mean = 127.5 + 10.0 * jax.random.normal(k_mean, (H, W, C), dtype=jnp.float32)
    img_std = 50.0 + jnp.abs(jax.random.normal(k_std, (H, W, C), dtype=jnp.float32))
    prep_stats = ImgPreprocessing(img_mean=img_mean, img_std=img_std)
    out_stats = jax.block_until_ready(prep_stats(img))
    ref_stats = (img.astype(jnp.float32) - img_mean[None, None]) / img_std[None, None]
    assert out_stats.shape == img.shape
    assert jnp.allclose(out_stats, ref_stats, rtol=1e-5, atol=1e-5), "stats path mismatch"

    # --- Path 3: ragged row count (R = 51 -> 32-row tile + masked partial edge block) ---
    B2, T2 = 3, 17
    img2 = jax.random.randint(k_img2, (B2, T2, H, W, C), 0, 256, dtype=jnp.int32).astype(jnp.uint8)
    out2 = jax.block_until_ready(prep_scale(img2))
    assert jnp.allclose(out2, img2.astype(jnp.float32) / 255.0, rtol=1e-6, atol=1e-6), \
        "ragged-edge scale path mismatch"
    out2s = jax.block_until_ready(prep_stats(img2))
    ref2s = (img2.astype(jnp.float32) - img_mean[None, None]) / img_std[None, None]
    assert jnp.allclose(out2s, ref2s, rtol=1e-5, atol=1e-5), "ragged-edge stats path mismatch"

    # --- Path 4: scale_img=False short-circuit (pure cast, no kernel) ---
    prep_id = ImgPreprocessing(scale_img=False)
    out_id = jax.block_until_ready(prep_id(img))
    assert jnp.allclose(out_id, img.astype(jnp.float32)), "identity path mismatch"

    print("KERNEL_OK")
</pallas_src>

<mosaic_0001>
module attributes {stable_mosaic.version = 11 : i64} {
  func.func @_scale_kernel(%arg0: i32, %arg1: i32, %arg2: memref<16x768xi8, #tpu.memory_space<vmem>>, %arg3: memref<16x768xf32, #tpu.memory_space<vmem>>) attributes {dimension_semantics = [#tpu.dimension_semantics<parallel>, #tpu.dimension_semantics<parallel>], iteration_bounds = array<i64: 1, 1>, scalar_prefetch = 0 : i64, scratch_operands = 0 : i64, tpu.core_type = #tpu.core_type<tc>, window_params = [{transform_indices = @transform_0, window_bounds = array<i64: 16, 768>}, {transform_indices = @transform_1, window_bounds = array<i64: 16, 768>}]} {
    %c0 = arith.constant 0 : index
    %c0_0 = arith.constant 0 : index
    %0 = vector.load %arg2[%c0, %c0_0] : memref<16x768xi8, #tpu.memory_space<vmem>>, vector<16x768xi8>
    %1 = arith.uitofp %0 : vector<16x768xi8> to vector<16x768xf32>
    %cst = arith.constant 0.00392156886 : f32
    %2 = vector.broadcast %cst : f32 to vector<16x768xf32>
    %3 = arith.mulf %1, %2 : vector<16x768xf32>
    %c0_1 = arith.constant 0 : index
    %c0_2 = arith.constant 0 : index
    %4 = vector.load %arg3[%c0_1, %c0_2] : memref<16x768xf32, #tpu.memory_space<vmem>>, vector<16x768xf32>
    tpu.vector_store %arg3[%c0_1, %c0_2], %3 {strides = array<i32>} : memref<16x768xf32, #tpu.memory_space<vmem>>, vector<16x768xf32>,
    return
  }
  func.func @transform_0(%arg0: i32, %arg1: i32) -> (i32, i32) {
    %c0_i32 = arith.constant 0 : i32
    return %arg1, %arg0 : i32, i32
  }
  func.func @transform_1(%arg0: i32, %arg1: i32) -> (i32, i32) {
    %c0_i32 = arith.constant 0 : i32
    return %arg1, %arg0 : i32, i32
  }
}

</mosaic_0001>

<llo_original>
// kernel: tpu_custom_call.1
$region0: #{tpu_custom_call.1}
  #allocation0 [shape = 'u32[]', space=smem, size = 0x4, offset = 0x4, fixed_abs, tag = 'smem constant byte address 0x4 - core index']
  #allocation1 [shape = 'u32[72,128]{1,0:T(1,128)}', space=vmem, size = 0x9000, scoped, tag = 'internal scratch']
  %s0 = inlined_call_operand.hbm [shape: u8[16,768], index: 0, kind: input, shape index: {}]
  %s1 = inlined_call_operand.hbm [shape: f32[16,768], index: 1, kind: output, shape index: {}]
  %s2 = sld [smem:[#allocation0]]
  $region18: #{tpu_custom_call.1} parent=0
    _
  %s4 = ssub.s32 1, %s2
  %s5 = scalar_select 0, %s4, %s2
  $region1: #{tpu_custom_call.1} parent=0
    #allocation2 [shape = 'u8[12288]{0}', space=vmem, size = 0x3000, scoped, tag = 'input window, operand 0, single buffered']
    #allocation3 [shape = 's32[1]{0}', space=sflag, size = 0x4, scoped, tag = 'scoped memory for tpu_custom_call.1']
    #allocation4 [shape = 's32[1]{0}', space=sflag, size = 0x4, scoped, tag = 'scoped memory for tpu_custom_call.1']
    #allocation5 [shape = 'u8[49152]{0}', space=vmem, size = 0xc000, scoped, tag = 'output window, operand 0, single buffered']
    %6 = vsyncpa [#allocation3], 0
    %7 = vsyncpa [#allocation4], 0
    // Predicated region
    $region2: #{tpu_custom_call.1} parent=1 // pred_check
      _
    $region3: #{tpu_custom_call.1} parent=1 // pred_check_branch
      %9 = sbr.rel (0) target = $region5
    $region4: #{tpu_custom_call.1} parent=1 // pred_region
      %11 = vsyncadd [#allocation3], 0
      %s12 = sshll.u32 %s0, 4
      %s13 = int_to_ptr.hbm [resolvable:$true] %s12
      %s14 = sshll.u32 [#allocation2], 4
      %s15 = int_to_ptr.vmem [resolvable:$true] %s14
      %20 = dma.hbm_to_vmem [thread:$0]  %s13, 384, %s15, [#allocation3], 192, 192, 12
    $region5: #{tpu_custom_call.1} parent=1 // pred_fallthru
      _
    // Predicated region
    $region6: #{tpu_custom_call.1} parent=1 // pred_check
      _
    $region7: #{tpu_custom_call.1} parent=1 // pred_check_branch
      %22 = sbr.rel (0) target = $region9
    $region8: #{tpu_custom_call.1} parent=1 // pred_region
      %24 = dma.done [#allocation3], 384
    $region9: #{tpu_custom_call.1} parent=1 // pred_fallthru
      _
    %v25 = vld [vmem:[#allocation2] sm:$0xff]
    %v26 = vld [vmem:[#allocation2 + $0x8] sm:$0xf]
    %v27 = vld [vmem:[#allocation2 + $0xc] sm:$0xff]
    %v28 = vld [vmem:[#allocation2 + $0x14] sm:$0xf]
    %v29 = vunpack.c.0.s8 %v25
    %v30 = vunpack.c.1.s8 %v25
    %v31 = vunpack.c.2.s8 %v25
    %v32 = vunpack.c.3.s8 %v25
    %v33 = vunpack.c.0.s8 %v26
    %v34 = vunpack.c.1.s8 %v26
    %v35 = vunpack.c.0.s8 %v27
    %v36 = vunpack.c.1.s8 %v27
    %v37 = vunpack.c.2.s8 %v27
    %v38 = vunpack.c.3.s8 %v27
    %v39 = vunpack.c.0.s8 %v28
    %v40 = vunpack.c.1.s8 %v28
    %v41 = vand.u32 %v29, 255
    %v42 = vand.u32 %v30, 255
    %v43 = vand.u32 %v31, 255
    %v44 = vand.u32 %v32, 255
    %v45 = vand.u32 %v33, 255
    %v46 = vand.u32 %v34, 255
    %v47 = vand.u32 %v35, 255
    %v48 = vand.u32 %v36, 255
    %v49 = vand.u32 %v37, 255
    %v50 = vand.u32 %v38, 255
    %v51 = vand.u32 %v39, 255
    %v52 = vand.u32 %v40, 255
    %v53 = vcvt.s32.f32 %v41
    %v54 = vcvt.s32.f32 %v42
    %v55 = vcvt.s32.f32 %v43
    %v56 = vcvt.s32.f32 %v44
    %v57 = vcvt.s32.f32 %v45
    %v58 = vcvt.s32.f32 %v46
    %v59 = vcvt.s32.f32 %v47
    %v60 = vcvt.s32.f32 %v48
    %v61 = vcvt.s32.f32 %v49
    %v62 = vcvt.s32.f32 %v50
    %v63 = vcvt.s32.f32 %v51
    %v64 = vcvt.s32.f32 %v52
    %v65 = vmul.f32 %v53, 0.003921569
    %v66 = vmul.f32 %v54, 0.003921569
    %v67 = vmul.f32 %v55, 0.003921569
    %v68 = vmul.f32 %v56, 0.003921569
    %v69 = vmul.f32 %v57, 0.003921569
    %v70 = vmul.f32 %v58, 0.003921569
    %v71 = vmul.f32 %v59, 0.003921569
    %v72 = vmul.f32 %v60, 0.003921569
    %v73 = vmul.f32 %v61, 0.003921569
    %v74 = vmul.f32 %v62, 0.003921569
    %v75 = vmul.f32 %v63, 0.003921569
    %v76 = vmul.f32 %v64, 0.003921569
    %77 = vst [vmem:[#allocation5] sm:$0xff] %v65
    %78 = vst [vmem:[#allocation5 + $0x8] sm:$0xff] %v66
    %79 = vst [vmem:[#allocation5 + $0x10] sm:$0xff] %v67
    %80 = vst [vmem:[#allocation5 + $0x18] sm:$0xff] %v68
    %81 = vst [vmem:[#allocation5 + $0x20] sm:$0xff] %v69
    %82 = vst [vmem:[#allocation5 + $0x28] sm:$0xff] %v70
    %83 = vst [vmem:[#allocation5 + $0x30] sm:$0xff] %v71
    %84 = vst [vmem:[#allocation5 + $0x38] sm:$0xff] %v72
    %85 = vst [vmem:[#allocation5 + $0x40] sm:$0xff] %v73
    %86 = vst [vmem:[#allocation5 + $0x48] sm:$0xff] %v74
    %87 = vst [vmem:[#allocation5 + $0x50] sm:$0xff] %v75
    %88 = vst [vmem:[#allocation5 + $0x58] sm:$0xff] %v76
    // Predicated region
    $region10: #{tpu_custom_call.1} parent=1 // pred_check
      _
    $region11: #{tpu_custom_call.1} parent=1 // pred_check_branch
      %90 = sbr.rel (0) target = $region13
    $region12: #{tpu_custom_call.1} parent=1 // pred_region
      %92 = vsyncadd [#allocation4], 0
      %s93 = sshll.u32 [#allocation5], 4
      %s94 = int_to_ptr.vmem [resolvable:$true] %s93
      %s95 = sshll.u32 %s1, 4
      %s96 = int_to_ptr.hbm [resolvable:$true] %s95
      %101 = dma.vmem_to_hbm [thread:$0]  %s94, 1536, %s96, [#allocation4], 768, 768, 48
    $region13: #{tpu_custom_call.1} parent=1 // pred_fallthru
      _
    // Predicated region
    $region14: #{tpu_custom_call.1} parent=1 // pred_check
      _
    $region15: #{tpu_custom_call.1} parent=1 // pred_check_branch
      %103 = sbr.rel (0) target = $region17
    $region16: #{tpu_custom_call.1} parent=1 // pred_region
      %105 = dma.done [#allocation4], 1536
    $region17: #{tpu_custom_call.1} parent=1 // pred_fallthru
      _
    %106 = vsyncpa [#allocation3], 1
    %107 = vsyncpa [#allocation4], 1

</llo_original>
